<compile_context>
chip_gen: v6e
topology: v6e:2x2x1
jax: 0.10.0
libtpu: 0.0.40
codegen_flags: <defaults>
</compile_context>

<pallas_src>
import math

import jax
import jax.numpy as jnp
from jax.experimental import pallas as pl
from jax.experimental.pallas import tpu as pltpu


def _round_up(x, m):
    return (x + m - 1) // m * m


def _int_range(dtype_str):
    return (-128.0, 127.0) if dtype_str == "qint8" else (0.0, 255.0)


def _fake_quant_to_bf16(x, scale, zp, qmin, qmax):
    """Per-tensor affine fake-quant, exact algebraic simplification of
    (clamp(round(x/s)+zp, qmin, qmax) - zp) * s, returned as bf16 (MXU-ready).
    Runs once per operand in the wrapper as a fused elementwise pass."""
    scale = jnp.asarray(scale, jnp.float32)
    zp = jnp.asarray(zp, jnp.float32)
    q = jnp.clip(jnp.round(x.astype(jnp.float32) / scale), qmin - zp, qmax - zp)
    return (q * scale).astype(jnp.bfloat16)


def _bf16_matmul_kernel(a_ref, b_ref, o_ref, acc_ref):
    # a_ref: (tm, tk) bf16, b_ref: (tk, tn) bf16, o_ref: (tm, tn) out dtype,
    # acc_ref: (tm, tn) f32 scratch. Reduction axis k = grid axis 3 (innermost).
    k = pl.program_id(3)

    @pl.when(k == 0)
    def _():
        acc_ref[...] = jnp.zeros_like(acc_ref)

    acc_ref[...] += jnp.dot(
        a_ref[...], b_ref[...], preferred_element_type=jnp.float32
    )

    @pl.when(k == pl.num_programs(3) - 1)
    def _():
        o_ref[...] = acc_ref[...].astype(o_ref.dtype)


def qmatmul_debug(
    m1,
    m2,
    scale_m1,
    zp_m1,
    scale_m2=1.0,
    zp_m2=0.0,
    dtype_m1="quint8",
    dtype_m2="qint8",
    *,
    tm=None,
    tn=None,
    tk=None,
):
    """QMatmulDebug.forward. m1: (..., M, N), m2: (..., N, K) -> (..., M, K)."""
    qmin1, qmax1 = _int_range(dtype_m1)
    qmin2, qmax2 = _int_range(dtype_m2)

    assert m1.shape[-1] == m2.shape[-2], "contraction dims must match"
    if m1.ndim == 2 and m2.ndim == 2:
        batch_dims = ()
    else:
        assert m1.shape[:-2] == m2.shape[:-2], "batch dims must match"
        batch_dims = m1.shape[:-2]
    B = math.prod(batch_dims) if batch_dims else 1

    M, N = m1.shape[-2], m1.shape[-1]
    K = m2.shape[-1]
    out_dtype = m1.dtype

    # ---- one-shot fake-quant to bf16 in HBM (fused elementwise pass) ----
    a = _fake_quant_to_bf16(m1.reshape(B, M, N), scale_m1, zp_m1, qmin1, qmax1)
    b = _fake_quant_to_bf16(m2.reshape(B, N, K), scale_m2, zp_m2, qmin2, qmax2)

    # ---- tile selection: lane dims multiples of 128, sublane multiples of 8.
    # Default 512x512 output tiles; grow to 1024 where the shape allows (still
    # <= ~24 MiB double-buffered working set, safe for v7x's 64 MiB VMEM).
    if tm is None:
        tm = 1024 if M >= 1024 else 512
    if tn is None:
        tn = 1024 if K >= 1024 else 512
    if tk is None:
        tk = 512
    tm = min(tm, _round_up(M, 8))
    tk = min(tk, _round_up(N, 128))
    tn = min(tn, _round_up(K, 128))

    Mp = _round_up(M, tm)
    Np = _round_up(N, tk)
    Kp = _round_up(K, tn)

    # Pad only if needed (avoids an HBM copy when shapes are already aligned).
    # Zero padding is exact: padded contraction rows/cols contribute nothing;
    # padded output rows/cols are sliced off below.
    if (Mp, Np) != (M, N):
        a = jnp.pad(a, ((0, 0), (0, Mp - M), (0, Np - N)))
    if (Np, Kp) != (N, K):
        b = jnp.pad(b, ((0, 0), (0, Np - N), (0, Kp - K)))

    # VMEM budget derived from actual tile sizes (double-buffered bf16 inputs,
    # double-buffered output, f32 accumulator) + headroom, capped at 40 MiB.
    out_itemsize = jnp.dtype(out_dtype).itemsize
    tile_bytes = (
        2 * tm * tk * 2          # a tiles, double-buffered, bf16
        + 2 * tk * tn * 2        # b tiles, double-buffered, bf16
        + 2 * tm * tn * out_itemsize  # output tiles, double-buffered
        + tm * tn * 4            # f32 accumulator scratch
    )
    vmem_limit = int(max(min(tile_bytes + (8 << 20), 40 << 20), tile_bytes + (2 << 20)))

    grid = (B, Mp // tm, Kp // tn, Np // tk)

    out = pl.pallas_call(
        _bf16_matmul_kernel,
        out_shape=jax.ShapeDtypeStruct((B, Mp, Kp), out_dtype),
        grid_spec=pltpu.PrefetchScalarGridSpec(
            num_scalar_prefetch=0,
            grid=grid,
            in_specs=[
                pl.BlockSpec((None, tm, tk), lambda bb, i, j, k: (bb, i, k)),
                pl.BlockSpec((None, tk, tn), lambda bb, i, j, k: (bb, k, j)),
            ],
            out_specs=pl.BlockSpec((None, tm, tn), lambda bb, i, j, k: (bb, i, j)),
            scratch_shapes=[pltpu.VMEM((tm, tn), jnp.float32)],
        ),
        compiler_params=pltpu.CompilerParams(
            dimension_semantics=("parallel", "parallel", "parallel", "arbitrary"),
            vmem_limit_bytes=vmem_limit,
        ),
    )(a, b)

    out = out[:, :M, :K]
    return out.reshape(*batch_dims, M, K) if batch_dims else out.reshape(M, K)


def _reference(m1, m2, scale_m1, zp_m1, dtype_m1, scale_m2, zp_m2, dtype_m2):
    """Pure-JAX reference matching the kernel numerics (bf16 operands, f32 acc)."""
    qmin1, qmax1 = _int_range(dtype_m1)
    qmin2, qmax2 = _int_range(dtype_m2)
    a = _fake_quant_to_bf16(m1, scale_m1, zp_m1, qmin1, qmax1).astype(jnp.float32)
    b = _fake_quant_to_bf16(m2, scale_m2, zp_m2, qmin2, qmax2).astype(jnp.float32)
    return jnp.matmul(a, b).astype(m1.dtype)


if __name__ == "__main__":
    key = jax.random.PRNGKey(0)
    k1, k2, k3, k4, k5, k6 = jax.random.split(key, 6)

    # Module-default quant configs: m1 quint8 (asym activation), m2 qint8 (sym weight).
    scale_m1, zp_m1 = 0.05, 128.0
    scale_m2, zp_m2 = 0.04, 0.0

    # ---- 2D case from the docstring: m1 [m, n], m2 [n, k] ----
    m, n, k = 8, 32, 16
    m1 = 0.5 * jax.random.normal(k1, (m, n), dtype=jnp.float32)
    m2 = 0.5 * jax.random.normal(k2, (n, k), dtype=jnp.float32)
    out = qmatmul_debug(m1, m2, scale_m1, zp_m1, scale_m2, zp_m2,
                        dtype_m1="quint8", dtype_m2="qint8")
    out = jax.block_until_ready(out)
    ref = _reference(m1, m2, scale_m1, zp_m1, "quint8", scale_m2, zp_m2, "qint8")
    assert out.shape == (m, k)
    assert jnp.max(jnp.abs(out - ref)) < 2e-3

    # ---- batched (attention-style) case: (B, H, S, D) x (B, H, D, T) ----
    B, H, S, D, T = 2, 4, 8, 32, 8
    m1b = 0.5 * jax.random.normal(k3, (B, H, S, D), dtype=jnp.float32)
    m2b = 0.5 * jax.random.normal(k4, (B, H, D, T), dtype=jnp.float32)
    outb = qmatmul_debug(m1b, m2b, scale_m1, zp_m1, scale_m2, zp_m2,
                         dtype_m1="quint8", dtype_m2="qint8")
    outb = jax.block_until_ready(outb)
    refb = _reference(m1b, m2b, scale_m1, zp_m1, "quint8", scale_m2, zp_m2, "qint8")
    assert outb.shape == (B, H, S, T)
    assert jnp.max(jnp.abs(outb - refb)) < 2e-3

    # ---- multi-tile case exercising the M/N/K grid + accumulator path ----
    Bt, Mt, Nt, Kt = 2, 256, 384, 256
    m1t = 0.5 * jax.random.normal(k5, (Bt, Mt, Nt), dtype=jnp.float32)
    m2t = 0.5 * jax.random.normal(k6, (Bt, Nt, Kt), dtype=jnp.float32)
    outt = qmatmul_debug(m1t, m2t, scale_m1, zp_m1, scale_m2, zp_m2,
                         dtype_m1="quint8", dtype_m2="qint8",
                         tm=128, tn=128, tk=128)
    outt = jax.block_until_ready(outt)
    reft = _reference(m1t, m2t, scale_m1, zp_m1, "quint8", scale_m2, zp_m2, "qint8")
    assert outt.shape == (Bt, Mt, Kt)
    assert jnp.max(jnp.abs(outt - reft)) < 5e-3

    print("KERNEL_OK")
</pallas_src>

<mosaic_0001>
module attributes {stable_mosaic.version = 11 : i64} {
  func.func @_bf16_matmul_kernel(%arg0: i32, %arg1: i32, %arg2: i32, %arg3: i32, %arg4: memref<1x8x128xbf16, #tpu.memory_space<vmem>>, %arg5: memref<1x128x128xbf16, #tpu.memory_space<vmem>>, %arg6: memref<1x8x128xf32, #tpu.memory_space<vmem>>, %arg7: memref<8x128xf32, #tpu.memory_space<vmem>>) attributes {dimension_semantics = [#tpu.dimension_semantics<parallel>, #tpu.dimension_semantics<parallel>, #tpu.dimension_semantics<parallel>, #tpu.dimension_semantics<arbitrary>], iteration_bounds = array<i64: 1, 1, 1, 1>, scalar_prefetch = 0 : i64, scratch_operands = 1 : i64, tpu.core_type = #tpu.core_type<tc>, window_params = [{transform_indices = @transform_0, window_bounds = array<i64: 1, 8, 128>}, {transform_indices = @transform_1, window_bounds = array<i64: 1, 128, 128>}, {transform_indices = @transform_2, window_bounds = array<i64: 1, 8, 128>}]} {
    %c0_i32 = arith.constant 0 : i32
    %0 = arith.cmpi eq, %arg3, %c0_i32 : i32
    %1 = arith.extui %0 : i1 to i32
    %c0_i32_0 = arith.constant 0 : i32
    %2 = arith.cmpi ne, %1, %c0_i32_0 : i32
    scf.if %2 {
      %cst_12 = arith.constant 0.000000e+00 : f32
      %14 = vector.broadcast %cst_12 : f32 to vector<8x128xf32>
      %c0_13 = arith.constant 0 : index
      %c0_14 = arith.constant 0 : index
      %15 = vector.load %arg7[%c0_13, %c0_14] : memref<8x128xf32, #tpu.memory_space<vmem>>, vector<8x128xf32>
      tpu.vector_store %arg7[%c0_13, %c0_14], %14 {strides = array<i32>} : memref<8x128xf32, #tpu.memory_space<vmem>>, vector<8x128xf32>,
    } else {
    }
    %c0 = arith.constant 0 : index
    %c0_1 = arith.constant 0 : index
    %3 = vector.load %arg7[%c0, %c0_1] : memref<8x128xf32, #tpu.memory_space<vmem>>, vector<8x128xf32>
    %c0_2 = arith.constant 0 : index
    %c0_3 = arith.constant 0 : index
    %c0_4 = arith.constant 0 : index
    %4 = vector.load %arg4[%c0_2, %c0_3, %c0_4] : memref<1x8x128xbf16, #tpu.memory_space<vmem>>, vector<1x8x128xbf16>
    %5 = vector.shape_cast %4 : vector<1x8x128xbf16> to vector<8x128xbf16>
    %c0_5 = arith.constant 0 : index
    %c0_6 = arith.constant 0 : index
    %c0_7 = arith.constant 0 : index
    %6 = vector.load %arg5[%c0_5, %c0_6, %c0_7] : memref<1x128x128xbf16, #tpu.memory_space<vmem>>, vector<1x128x128xbf16>
    %7 = vector.shape_cast %6 : vector<1x128x128xbf16> to vector<128x128xbf16>
    %cst = arith.constant dense<0.000000e+00> : vector<8x128xf32>
    %8 = tpu.matmul %5, %7, %cst {dimension_numbers = #tpu.dot_dimension_numbers<[1], [0], [0], [1], [0, 0, 1, 1], [], []>} : vector<8x128xbf16>, vector<128x128xbf16>, vector<8x128xf32> -> vector<8x128xf32>
    %9 = arith.addf %3, %8 : vector<8x128xf32>
    %c0_8 = arith.constant 0 : index
    %c0_9 = arith.constant 0 : index
    %10 = vector.load %arg7[%c0_8, %c0_9] : memref<8x128xf32, #tpu.memory_space<vmem>>, vector<8x128xf32>
    tpu.vector_store %arg7[%c0_8, %c0_9], %9 {strides = array<i32>} : memref<8x128xf32, #tpu.memory_space<vmem>>, vector<8x128xf32>,
    %c0_i32_10 = arith.constant 0 : i32
    %11 = arith.cmpi eq, %arg3, %c0_i32_10 : i32
    %12 = arith.extui %11 : i1 to i32
    %c0_i32_11 = arith.constant 0 : i32
    %13 = arith.cmpi ne, %12, %c0_i32_11 : i32
    scf.if %13 {
      %c0_12 = arith.constant 0 : index
      %c0_13 = arith.constant 0 : index
      %14 = vector.load %arg7[%c0_12, %c0_13] : memref<8x128xf32, #tpu.memory_space<vmem>>, vector<8x128xf32>
      %c0_14 = arith.constant 0 : index
      %c0_15 = arith.constant 0 : index
      %c0_16 = arith.constant 0 : index
      %15 = vector.load %arg6[%c0_14, %c0_15, %c0_16] : memref<1x8x128xf32, #tpu.memory_space<vmem>>, vector<1x8x128xf32>
      %16 = vector.shape_cast %15 : vector<1x8x128xf32> to vector<8x128xf32>
      %17 = vector.shape_cast %14 : vector<8x128xf32> to vector<1x8x128xf32>
      tpu.vector_store %arg6[%c0_14, %c0_15, %c0_16], %17 {strides = array<i32>} : memref<1x8x128xf32, #tpu.memory_space<vmem>>, vector<1x8x128xf32>,
    } else {
    }
    return
  }
  func.func @transform_0(%arg0: i32, %arg1: i32, %arg2: i32, %arg3: i32) -> (i32, i32, i32) {
    %c0_i32 = arith.constant 0 : i32
    return %arg0, %arg1, %arg3 : i32, i32, i32
  }
  func.func @transform_1(%arg0: i32, %arg1: i32, %arg2: i32, %arg3: i32) -> (i32, i32, i32) {
    %c0_i32 = arith.constant 0 : i32
    return %arg0, %arg3, %arg2 : i32, i32, i32
  }
  func.func @transform_2(%arg0: i32, %arg1: i32, %arg2: i32, %arg3: i32) -> (i32, i32, i32) {
    %c0_i32 = arith.constant 0 : i32
    return %arg0, %arg1, %arg2 : i32, i32, i32
  }
}

</mosaic_0001>

<llo_original>
// kernel: tpu_custom_call.1
$region0: #{tpu_custom_call.1}
  #allocation0 [shape = 'u32[]', space=smem, size = 0x4, offset = 0x4, fixed_abs, tag = 'smem constant byte address 0x4 - core index']
  #allocation1 [shape = 'u32[144,128]{1,0:T(1,128)}', space=vmem, size = 0x12000, scoped, tag = 'internal scratch']
  #allocation2 [shape = 'f32[8,128]{1,0:T(8,128)}', space=vmem, size = 0x1000, scoped, tag = 'scratch operand']
  %s0 = inlined_call_operand.hbm [shape: bf16[1,8,128], index: 0, kind: input, shape index: {}]
  %s1 = inlined_call_operand.hbm [shape: bf16[1,128,128], index: 1, kind: input, shape index: {}]
  %s2 = inlined_call_operand.hbm [shape: f32[1,8,128], index: 2, kind: output, shape index: {}]
  %s3 = sld [smem:[#allocation0]]
  $region34: #{tpu_custom_call.1} parent=0
    _
  %s5 = ssub.s32 1, %s3
  %s6 = scalar_select 0, %s5, %s3
  $region1: #{tpu_custom_call.1} parent=0
    #allocation3 [shape = 'u8[2048]{0}', space=vmem, size = 0x800, scoped, tag = 'input window, operand 0, single buffered']
    #allocation4 [shape = 's32[1]{0}', space=sflag, size = 0x4, scoped, tag = 'scoped memory for tpu_custom_call.1']
    #allocation5 [shape = 's32[1]{0}', space=sflag, size = 0x4, scoped, tag = 'scoped memory for tpu_custom_call.1']
    #allocation6 [shape = 'u8[32768]{0}', space=vmem, size = 0x8000, scoped, tag = 'input window, operand 1, single buffered']
    #allocation7 [shape = 's32[1]{0}', space=sflag, size = 0x4, scoped, tag = 'scoped memory for tpu_custom_call.1']
    #allocation8 [shape = 'u8[4096]{0}', space=vmem, size = 0x1000, scoped, tag = 'output window, operand 0, single buffered']
    %7 = vsyncpa [#allocation4], 0
    %8 = vsyncpa [#allocation7], 0
    %9 = vsyncpa [#allocation5], 0
    // Predicated region
    $region2: #{tpu_custom_call.1} parent=1 // pred_check
      _
    $region3: #{tpu_custom_call.1} parent=1 // pred_check_branch
      %11 = sbr.rel (0) target = $region5
    $region4: #{tpu_custom_call.1} parent=1 // pred_region
      %s13 = ssub.s32 64, 64
      %14 = vsyncadd [#allocation4], %s13
      %s16 = sshll.u32 [#allocation3], 4
      %s17 = int_to_ptr.vmem [resolvable:$true] %s16
      %19 = dma.hbm_to_vmem [thread:$0]  %s0, 64, %s17, [#allocation4]
    $region5: #{tpu_custom_call.1} parent=1 // pred_fallthru
      _
    // Predicated region
    $region6: #{tpu_custom_call.1} parent=1 // pred_check
      _
    $region7: #{tpu_custom_call.1} parent=1 // pred_check_branch
      %21 = sbr.rel (0) target = $region9
    $region8: #{tpu_custom_call.1} parent=1 // pred_region
      %s23 = ssub.s32 1024, 1024
      %24 = vsyncadd [#allocation7], %s23
      %s25 = sshll.u32 [#allocation6], 4
      %s26 = int_to_ptr.vmem [resolvable:$true] %s25
      %31 = dma.hbm_to_vmem [thread:$0]  %s1, 1024, %s26, [#allocation7], 64, 64, 4
    $region9: #{tpu_custom_call.1} parent=1 // pred_fallthru
      _
    // Predicated region
    $region10: #{tpu_custom_call.1} parent=1 // pred_check
      _
    $region11: #{tpu_custom_call.1} parent=1 // pred_check_branch
      %33 = sbr.rel (0) target = $region13
    $region12: #{tpu_custom_call.1} parent=1 // pred_region
      %34 = dma.done [#allocation4], 64
    $region13: #{tpu_custom_call.1} parent=1 // pred_fallthru
      _
    // Predicated region
    $region14: #{tpu_custom_call.1} parent=1 // pred_check
      _
    $region15: #{tpu_custom_call.1} parent=1 // pred_check_branch
      %36 = sbr.rel (0) target = $region17
    $region16: #{tpu_custom_call.1} parent=1 // pred_region
      %37 = dma.done [#allocation7], 1024
    $region17: #{tpu_custom_call.1} parent=1 // pred_fallthru
      _
    %p39 = scmp.eq.s32.totalorder 0, 0
    // Predicated region
    $region18: #{tpu_custom_call.1} parent=1 // pred_check
      %p40 = pneg %p39
    $region19: #{tpu_custom_call.1} parent=1 // pred_check_branch
      %42 = sbr.rel (%p40) target = $region21
    $region20: #{tpu_custom_call.1} parent=1 // pred_region
      %43 = vst [vmem:[#allocation2] sm:$0xff] 0.0
    $region21: #{tpu_custom_call.1} parent=1 // pred_fallthru
      _
    %v44 = vld [vmem:[#allocation2] sm:$0xff]
    %v45 = vld [vmem:[#allocation3] sm:$0xf]
    %v46 = vld [vmem:[#allocation6] sm:$0xf]
    %v47 = vld [vmem:[#allocation6 + $0x4] sm:$0xf]
    %v48 = vld [vmem:[#allocation6 + $0x8] sm:$0xf]
    %v49 = vld [vmem:[#allocation6 + $0xc] sm:$0xf]
    %v50 = vld [vmem:[#allocation6 + $0x10] sm:$0xf]
    %v51 = vld [vmem:[#allocation6 + $0x14] sm:$0xf]
    %v52 = vld [vmem:[#allocation6 + $0x18] sm:$0xf]
    %v53 = vld [vmem:[#allocation6 + $0x1c] sm:$0xf]
    %v54 = vld [vmem:[#allocation6 + $0x20] sm:$0xf]
    %v55 = vld [vmem:[#allocation6 + $0x24] sm:$0xf]
    %v56 = vld [vmem:[#allocation6 + $0x28] sm:$0xf]
    %v57 = vld [vmem:[#allocation6 + $0x2c] sm:$0xf]
    %v58 = vld [vmem:[#allocation6 + $0x30] sm:$0xf]
    %v59 = vld [vmem:[#allocation6 + $0x34] sm:$0xf]
    %v60 = vld [vmem:[#allocation6 + $0x38] sm:$0xf]
    %v61 = vld [vmem:[#allocation6 + $0x3c] sm:$0xf]
    %v78 = vunpack.c.l.b16 %v46
    %v79 = vunpack.c.l.b16 %v47
    %v80 = vunpack.c.l.b16 %v48
    %v81 = vunpack.c.l.b16 %v49
    %v82 = vunpack.c.l.b16 %v50
    %v83 = vunpack.c.l.b16 %v51
    %v84 = vunpack.c.l.b16 %v52
    %v85 = vunpack.c.l.b16 %v53
    %v86 = vunpack.c.l.b16 %v54
    %v87 = vunpack.c.l.b16 %v55
    %v88 = vunpack.c.l.b16 %v56
    %v89 = vunpack.c.l.b16 %v57
    %v90 = vunpack.c.l.b16 %v58
    %v91 = vunpack.c.l.b16 %v59
    %v92 = vunpack.c.l.b16 %v60
    %v93 = vunpack.c.l.b16 %v61
    %v94 = vpack.c.b16 %v79, %v78
    %v95 = vpack.c.b16 %v81, %v80
    %v96 = vpack.c.b16 %v83, %v82
    %v97 = vpack.c.b16 %v85, %v84
    %v98 = vpack.c.b16 %v87, %v86
    %v99 = vpack.c.b16 %v89, %v88
    %v100 = vpack.c.b16 %v91, %v90
    %v101 = vpack.c.b16 %v93, %v92
    %110 = vmatprep.subr.bf16.mxu0 0
    %111 = vmatpush1.bf16.msra.mxu0 %v101
    %112 = vmatprep.subr.bf16.mxu0 0
    %113 = vmatpush1.bf16.msra.mxu0 %v100
    %114 = vmatprep.subr.bf16.mxu0 0
    %115 = vmatpush1.bf16.msra.mxu0 %v99
    %116 = vmatprep.subr.bf16.mxu0 0
    %117 = vmatpush1.bf16.msra.mxu0 %v98
    %118 = vmatprep.subr.bf16.mxu0 0
    %119 = vmatpush1.bf16.msra.mxu0 %v97
    %120 = vmatprep.subr.bf16.mxu0 0
    %121 = vmatpush1.bf16.msra.mxu0 %v96
    %122 = vmatprep.subr.bf16.mxu0 0
    %123 = vmatpush1.bf16.msra.mxu0 %v95
    %124 = vmatprep.subr.bf16.mxu0 0
    %125 = vmatpush1.bf16.msra.mxu0 %v94
    %126 = vmatprep.subr.bf16.mxu0 0
    %127 = vmatpush2.bf16.msra.mxu0 0
    %128 = vmatprep.subr.bf16.mxu0 0
    %129 = vmatpush2.bf16.msra.mxu0 0
    %130 = vmatprep.subr.bf16.mxu0 0
    %131 = vmatpush2.bf16.msra.mxu0 0
    %132 = vmatprep.subr.bf16.mxu0 0
    %133 = vmatpush2.bf16.msra.mxu0 0
    %134 = vmatprep.subr.bf16.mxu0 0
    %135 = vmatpush2.bf16.msra.mxu0 0
    %136 = vmatprep.subr.bf16.mxu0 0
    %137 = vmatpush2.bf16.msra.mxu0 0
    %138 = vmatprep.subr.bf16.mxu0 0
    %139 = vmatpush2.bf16.msra.mxu0 0
    %140 = vmatprep.subr.bf16.mxu0 0
    %141 = vmatpush2.bf16.msra.mxu0 0
    %142 = vmatprep.mubr.bf16.mxu0 0
    %143 = vmatmul.mubr.bf16.gmra.mxu0 %v45
    %v144 = vpop.f32.mrf.mxu0
    %v145 = vadd.f32 0.0, %v144
    %v146 = vpop.f32.mrf.mxu0
    %v147 = vpop.f32.mrf.mxu0
    %v148 = vpop.f32.mrf.mxu0
    %149 = vdwg.mxu0
    %v150 = vadd.f32 %v44, %v145
    %151 = vst [vmem:[#allocation2] sm:$0xff] %v150
    // Predicated region
    $region22: #{tpu_custom_call.1} parent=1 // pred_check
      %p152 = pneg %p39
    $region23: #{tpu_custom_call.1} parent=1 // pred_check_branch
      %154 = sbr.rel (%p152) target = $region25
    $region24: #{tpu_custom_call.1} parent=1 // pred_region
      %v155 = vld [vmem:[#allocation2] sm:$0xff]
      %156 = vst [vmem:[#allocation8] sm:$0xff] %v155
    $region25: #{tpu_custom_call.1} parent=1 // pred_fallthru
      _
    // Predicated region
    $region26: #{tpu_custom_call.1} parent=1 // pred_check
      _
    $region27: #{tpu_custom_call.1} parent=1 // pred_check_branch
      %158 = sbr.rel (0) target = $region29
    $region28: #{tpu_custom_call.1} parent=1 // pred_region
      %s160 = ssub.s32 128, 128
      %161 = vsyncadd [#allocation5], %s160
      %s163 = sshll.u32 [#allocation8], 4
      %s164 = int_to_ptr.vmem [resolvable:$true] %s163
      %166 = dma.vmem_to_hbm [thread:$0]  %s164, 128, %s2, [#allocation5]
    $region29: #{tpu_custom_call.1} parent=1 // pred_fallthru
      _
    // Predicated region
    $region30: #{tpu_custom_call.1} parent=1 // pred_check
      _
    $region31: #{tpu_custom_call.1} parent=1 // pred_check_branch
      %168 = sbr.rel (0) target = $region33
    $region32: #{tpu_custom_call.1} parent=1 // pred_region
      %169 = dma.done [#allocation5], 128
    $region33: #{tpu_custom_call.1} parent=1 // pred_fallthru
      _
    %170 = vsyncpa [#allocation4], 1
    %171 = vsyncpa [#allocation7], 1
    %172 = vsyncpa [#allocation5], 1

</llo_original>
